<compile_context>
chip_gen: v5e
topology: v5e:2x2
jax: 0.10.0
libtpu: 0.0.40
codegen_flags: <defaults>
</compile_context>

<pallas_src>
import jax
import jax.numpy as jnp
from jax.experimental import pallas as pl
from jax.experimental.pallas import tpu as pltpu


def mlp_kernel(x_ref, w1_ref, b1_ref, w2_ref, b2_ref, o_ref):
    # x_ref: (TB, 8); w1: (8, 64); b1: (1, 64); w2: (64, 8); b2_eff: (1, 8)
    x = x_ref[...]
    h = jnp.maximum(
        jnp.dot(x, w1_ref[...], preferred_element_type=jnp.float32) + b1_ref[...],
        0.0,
    )
    # b2_ref already contains the folded "-5.0" constant.
    o_ref[...] = (
        jnp.dot(h, w2_ref[...], preferred_element_type=jnp.float32) + b2_ref[...]
    ).astype(o_ref.dtype)


def mlp_forward(x, w1, b1, w2, b2_eff, *, tb=256):
    """y = relu(x @ w1 + b1) @ w2 + b2_eff   (b2_eff already includes -5.0)."""
    B, d_in = x.shape
    d_hidden = w1.shape[1]
    d_out = w2.shape[1]

    # Batch tile: multiple of 8 (sublane), capped at `tb`.
    TB = min(tb, max(8, ((B + 7) // 8) * 8))
    Bp = ((B + TB - 1) // TB) * TB
    if Bp != B:
        x = jnp.pad(x, ((0, Bp - B), (0, 0)))

    out = pl.pallas_call(
        mlp_kernel,
        out_shape=jax.ShapeDtypeStruct((Bp, d_out), jnp.float32),
        grid_spec=pltpu.PrefetchScalarGridSpec(
            num_scalar_prefetch=0,
            grid=(Bp // TB,),
            in_specs=[
                # Activations: tiled over the batch axis.
                pl.BlockSpec((TB, d_in), lambda i: (i, 0),
                             memory_space=pltpu.MemorySpace.VMEM),
                # Weights / biases: whole-array blocks, VMEM-resident across
                # every grid step (index_map is constant -> no re-DMA).
                pl.BlockSpec((d_in, d_hidden), lambda i: (0, 0),
                             memory_space=pltpu.MemorySpace.VMEM),
                pl.BlockSpec((1, d_hidden), lambda i: (0, 0),
                             memory_space=pltpu.MemorySpace.VMEM),
                pl.BlockSpec((d_hidden, d_out), lambda i: (0, 0),
                             memory_space=pltpu.MemorySpace.VMEM),
                pl.BlockSpec((1, d_out), lambda i: (0, 0),
                             memory_space=pltpu.MemorySpace.VMEM),
            ],
            out_specs=pl.BlockSpec((TB, d_out), lambda i: (i, 0),
                                   memory_space=pltpu.MemorySpace.VMEM),
        ),
        compiler_params=pltpu.CompilerParams(
            dimension_semantics=("parallel",),
        ),
    )(x, w1, b1, w2, b2_eff)
    return out[:B]


def _reference(x, w1, b1, w2, b2_eff):
    return jnp.dot(jnp.maximum(jnp.dot(x, w1) + b1, 0.0), w2) + b2_eff


if __name__ == "__main__":
    key = jax.random.PRNGKey(0)
    k_x, k_w1, k_b1, k_w2, k_b2, k_xb = jax.random.split(key, 6)

    # --- Parameters (PyTorch Linear default-init style), prepared once ---
    # fc1: Linear(8, 64) -> weight stored (in, out) = (8, 64), bias (1, 64)
    bound1 = 1.0 / jnp.sqrt(8.0)
    w1 = jax.random.uniform(k_w1, (8, 64), jnp.float32, -bound1, bound1)
    b1 = jax.random.uniform(k_b1, (1, 64), jnp.float32, -bound1, bound1)
    # fc2: Linear(64, 8) -> weight stored (in, out) = (64, 8), bias (1, 8)
    bound2 = 1.0 / jnp.sqrt(64.0)
    w2 = jax.random.uniform(k_w2, (64, 8), jnp.float32, -bound2, bound2)
    b2 = jax.random.uniform(k_b2, (1, 8), jnp.float32, -bound2, bound2)
    # Fold the module's constant add(-5.0) into the second bias ONCE.
    b2_eff = b2 - 5.0

    # --- Case 1: module-shaped input, x1 = randn(1, 8) ---
    x = jax.random.normal(k_x, (1, 8), dtype=jnp.float32)
    out = jax.block_until_ready(mlp_forward(x, w1, b1, w2, b2_eff))
    ref = _reference(x, w1, b1, w2, b2_eff)
    assert out.shape == (1, 8)
    assert jnp.allclose(out, ref, atol=1e-5), "mismatch vs reference (B=1)"

    # --- Case 2: batched input exercising the grid (2 tiles of 256 rows) ---
    xb = jax.random.normal(k_xb, (512, 8), dtype=jnp.float32)
    out_b = jax.block_until_ready(mlp_forward(xb, w1, b1, w2, b2_eff))
    ref_b = _reference(xb, w1, b1, w2, b2_eff)
    assert out_b.shape == (512, 8)
    assert jnp.allclose(out_b, ref_b, atol=1e-4), "mismatch vs reference (B=512)"

    print("KERNEL_OK")
</pallas_src>

<mosaic_0001>
module attributes {stable_mosaic.version = 11 : i64} {
  func.func @mlp_kernel(%arg0: i32, %arg1: memref<8x8xf32, #tpu.memory_space<vmem>>, %arg2: memref<8x64xf32, #tpu.memory_space<vmem>>, %arg3: memref<1x64xf32, #tpu.memory_space<vmem>>, %arg4: memref<64x8xf32, #tpu.memory_space<vmem>>, %arg5: memref<1x8xf32, #tpu.memory_space<vmem>>, %arg6: memref<8x8xf32, #tpu.memory_space<vmem>>) attributes {dimension_semantics = [#tpu.dimension_semantics<parallel>], iteration_bounds = array<i64: 1>, scalar_prefetch = 0 : i64, scratch_operands = 0 : i64, tpu.core_type = #tpu.core_type<tc>, window_params = [{transform_indices = @transform_0, window_bounds = array<i64: 8, 8>}, {pipeline_mode = #tpu.pipeline_mode<synchronous>, transform_indices = @transform_1, window_bounds = array<i64: 8, 64>}, {pipeline_mode = #tpu.pipeline_mode<synchronous>, transform_indices = @transform_2, window_bounds = array<i64: 1, 64>}, {pipeline_mode = #tpu.pipeline_mode<synchronous>, transform_indices = @transform_3, window_bounds = array<i64: 64, 8>}, {pipeline_mode = #tpu.pipeline_mode<synchronous>, transform_indices = @transform_4, window_bounds = array<i64: 1, 8>}, {transform_indices = @transform_5, window_bounds = array<i64: 8, 8>}]} {
    %c0 = arith.constant 0 : index
    %c0_0 = arith.constant 0 : index
    %0 = vector.load %arg1[%c0, %c0_0] : memref<8x8xf32, #tpu.memory_space<vmem>>, vector<8x8xf32>
    %c0_1 = arith.constant 0 : index
    %c0_2 = arith.constant 0 : index
    %1 = vector.load %arg2[%c0_1, %c0_2] : memref<8x64xf32, #tpu.memory_space<vmem>>, vector<8x64xf32>
    %cst = arith.constant dense<0.000000e+00> : vector<8x64xf32>
    %2 = tpu.matmul %0, %1, %cst {dimension_numbers = #tpu.dot_dimension_numbers<[1], [0], [0], [1], [0, 0, 1, 1], [], []>} : vector<8x8xf32>, vector<8x64xf32>, vector<8x64xf32> -> vector<8x64xf32>
    %c0_3 = arith.constant 0 : index
    %c0_4 = arith.constant 0 : index
    %3 = vector.load %arg3[%c0_3, %c0_4] : memref<1x64xf32, #tpu.memory_space<vmem>>, vector<1x64xf32>
    %4 = vector.broadcast %3 : vector<1x64xf32> to vector<8x64xf32>
    %5 = arith.addf %2, %4 : vector<8x64xf32>
    %cst_5 = arith.constant 0.000000e+00 : f32
    %6 = vector.broadcast %cst_5 : f32 to vector<8x64xf32>
    %7 = arith.maximumf %5, %6 : vector<8x64xf32>
    %c0_6 = arith.constant 0 : index
    %c0_7 = arith.constant 0 : index
    %8 = vector.load %arg4[%c0_6, %c0_7] : memref<64x8xf32, #tpu.memory_space<vmem>>, vector<64x8xf32>
    %cst_8 = arith.constant dense<0.000000e+00> : vector<8x8xf32>
    %9 = tpu.matmul %7, %8, %cst_8 {dimension_numbers = #tpu.dot_dimension_numbers<[1], [0], [0], [1], [0, 0, 1, 1], [], []>} : vector<8x64xf32>, vector<64x8xf32>, vector<8x8xf32> -> vector<8x8xf32>
    %c0_9 = arith.constant 0 : index
    %c0_10 = arith.constant 0 : index
    %10 = vector.load %arg5[%c0_9, %c0_10] : memref<1x8xf32, #tpu.memory_space<vmem>>, vector<1x8xf32>
    %11 = vector.broadcast %10 : vector<1x8xf32> to vector<8x8xf32>
    %12 = arith.addf %9, %11 : vector<8x8xf32>
    %c0_11 = arith.constant 0 : index
    %c0_12 = arith.constant 0 : index
    %13 = vector.load %arg6[%c0_11, %c0_12] : memref<8x8xf32, #tpu.memory_space<vmem>>, vector<8x8xf32>
    tpu.vector_store %arg6[%c0_11, %c0_12], %12 {strides = array<i32>} : memref<8x8xf32, #tpu.memory_space<vmem>>, vector<8x8xf32>,
    return
  }
  func.func @transform_0(%arg0: i32) -> (i32, i32) {
    %c0_i32 = arith.constant 0 : i32
    %c0_i32_0 = arith.constant 0 : i32
    return %arg0, %c0_i32 : i32, i32
  }
  func.func @transform_1(%arg0: i32) -> (i32, i32) {
    %c0_i32 = arith.constant 0 : i32
    %c0_i32_0 = arith.constant 0 : i32
    %c0_i32_1 = arith.constant 0 : i32
    return %c0_i32, %c0_i32_0 : i32, i32
  }
  func.func @transform_2(%arg0: i32) -> (i32, i32) {
    %c0_i32 = arith.constant 0 : i32
    %c0_i32_0 = arith.constant 0 : i32
    %c0_i32_1 = arith.constant 0 : i32
    return %c0_i32, %c0_i32_0 : i32, i32
  }
  func.func @transform_3(%arg0: i32) -> (i32, i32) {
    %c0_i32 = arith.constant 0 : i32
    %c0_i32_0 = arith.constant 0 : i32
    %c0_i32_1 = arith.constant 0 : i32
    return %c0_i32, %c0_i32_0 : i32, i32
  }
  func.func @transform_4(%arg0: i32) -> (i32, i32) {
    %c0_i32 = arith.constant 0 : i32
    %c0_i32_0 = arith.constant 0 : i32
    %c0_i32_1 = arith.constant 0 : i32
    return %c0_i32, %c0_i32_0 : i32, i32
  }
  func.func @transform_5(%arg0: i32) -> (i32, i32) {
    %c0_i32 = arith.constant 0 : i32
    %c0_i32_0 = arith.constant 0 : i32
    return %arg0, %c0_i32 : i32, i32
  }
}

</mosaic_0001>

<llo_original>
// kernel: tpu_custom_call.1
$region0: #{tpu_custom_call.1}
  #allocation0 [shape = 'u32[]', space=smem, size = 0x4, offset = 0x4, fixed_abs, tag = 'smem constant byte address 0x4 - core index']
  #allocation1 [shape = 'u32[72,128]{1,0:T(1,128)}', space=vmem, size = 0x9000, scoped, tag = 'internal scratch']
  %s0 = inlined_call_operand.vmem [shape: f32[8,8], index: 0, kind: input, shape index: {}]
  %s1 = inlined_call_operand.vmem [shape: f32[8,64], index: 1, kind: input, shape index: {}]
  %s2 = inlined_call_operand.vmem [shape: f32[1,64], index: 2, kind: input, shape index: {}]
  %s3 = inlined_call_operand.vmem [shape: f32[64,8], index: 3, kind: input, shape index: {}]
  %s4 = inlined_call_operand.vmem [shape: f32[1,8], index: 4, kind: input, shape index: {}]
  %s5 = inlined_call_operand.hbm [shape: f32[8,8], index: 5, kind: output, shape index: {}]
  %s6 = sld [smem:[#allocation0]]
  $region30: #{tpu_custom_call.1} parent=0
    _
  %s8 = ssub.s32 1, %s6
  %s9 = scalar_select 0, %s8, %s6
  $region1: #{tpu_custom_call.1} parent=0
    #allocation2 [shape = 'u8[4096]{0}', space=vmem, size = 0x1000, scoped, tag = 'output window, operand 0, single buffered']
    #allocation3 [shape = 's32[1]{0}', space=sflag, size = 0x4, scoped, tag = 'scoped memory for tpu_custom_call.1']
    %10 = vsyncpa [#allocation3], 0
    // Predicated region
    $region2: #{tpu_custom_call.1} parent=1 // pred_check
      _
    $region3: #{tpu_custom_call.1} parent=1 // pred_check_branch
      %12 = sbr.rel (0) target = $region5
    $region4: #{tpu_custom_call.1} parent=1 // pred_region
      _
    $region5: #{tpu_custom_call.1} parent=1 // pred_fallthru
      _
    // Predicated region
    $region6: #{tpu_custom_call.1} parent=1 // pred_check
      _
    $region7: #{tpu_custom_call.1} parent=1 // pred_check_branch
      %14 = sbr.rel (0) target = $region9
    $region8: #{tpu_custom_call.1} parent=1 // pred_region
      _
    $region9: #{tpu_custom_call.1} parent=1 // pred_fallthru
      _
    // Predicated region
    $region10: #{tpu_custom_call.1} parent=1 // pred_check
      _
    $region11: #{tpu_custom_call.1} parent=1 // pred_check_branch
      %16 = sbr.rel (0) target = $region13
    $region12: #{tpu_custom_call.1} parent=1 // pred_region
      _
    $region13: #{tpu_custom_call.1} parent=1 // pred_fallthru
      _
    // Predicated region
    $region14: #{tpu_custom_call.1} parent=1 // pred_check
      _
    $region15: #{tpu_custom_call.1} parent=1 // pred_check_branch
      %18 = sbr.rel (0) target = $region17
    $region16: #{tpu_custom_call.1} parent=1 // pred_region
      _
    $region17: #{tpu_custom_call.1} parent=1 // pred_fallthru
      _
    // Predicated region
    $region18: #{tpu_custom_call.1} parent=1 // pred_check
      _
    $region19: #{tpu_custom_call.1} parent=1 // pred_check_branch
      %20 = sbr.rel (0) target = $region21
    $region20: #{tpu_custom_call.1} parent=1 // pred_region
      _
    $region21: #{tpu_custom_call.1} parent=1 // pred_fallthru
      _
    %v21 = vld [vmem:[%s0] sm:$0xff]
    %v22 = vld [vmem:[%s1] sm:$0xff]
    %v23 = vld [vmem:[%s2] sm:$0x1]
    %v25 = vperm.slane %v23, 0
    %vm27 = vcmask 64512
    %v29 = vsel %vm27, %v21, 0
    %31 = vmatpush.msra.mxu0 0.0
    %32 = vmatpush.msra.mxu0 0.0
    %33 = vmatpush.msra.mxu0 0.0
    %34 = vmatpush.msra.mxu0 0.0
    %35 = vmatpush.msra.mxu0 0.0
    %36 = vmatpush.msra.mxu0 0.0
    %37 = vmatpush.msra.mxu0 0.0
    %38 = vmatpush.msra.mxu0 0.0
    %39 = vmatpush.msra.mxu0 0.0
    %40 = vmatpush.msra.mxu0 0.0
    %41 = vmatpush.msra.mxu0 0.0
    %42 = vmatpush.msra.mxu0 0.0
    %43 = vmatpush.msra.mxu0 0.0
    %44 = vmatpush.msra.mxu0 0.0
    %45 = vmatpush.msra.mxu0 0.0
    %46 = vmatpush.msra.mxu0 %v22
    %47 = vmatmul.f32.gmra.mxu0 %v29
    %v48 = vpop.f32.mrf.mxu0
    %v49 = vadd.f32 %v25, %v48
    %50 = vdwg.mxu0
    %v51 = vmax.f32 %v49, 0.0
    %v52 = vld [vmem:[%s3] sm:$0xff]
    %v53 = vld [vmem:[%s3 + $0x8] sm:$0xff]
    %v54 = vld [vmem:[%s3 + $0x10] sm:$0xff]
    %v55 = vld [vmem:[%s3 + $0x18] sm:$0xff]
    %v56 = vld [vmem:[%s3 + $0x20] sm:$0xff]
    %v57 = vld [vmem:[%s3 + $0x28] sm:$0xff]
    %v58 = vld [vmem:[%s3 + $0x30] sm:$0xff]
    %v59 = vld [vmem:[%s3 + $0x38] sm:$0xff]
    %v60 = vld [vmem:[%s4] sm:$0x1]
    %v62 = vperm.slane %v60, 0
    %vm64 = vcmask 523264
    %v66 = vsel %vm64, %v51, 0
    %68 = vmatpush.msra.mxu0 0.0
    %69 = vmatpush.msra.mxu0 0.0
    %70 = vmatpush.msra.mxu0 0.0
    %71 = vmatpush.msra.mxu0 0.0
    %72 = vmatpush.msra.mxu0 0.0
    %73 = vmatpush.msra.mxu0 0.0
    %74 = vmatpush.msra.mxu0 0.0
    %75 = vmatpush.msra.mxu0 0.0
    %76 = vmatpush.msra.mxu0 %v59
    %77 = vmatpush.msra.mxu0 %v58
    %78 = vmatpush.msra.mxu0 %v57
    %79 = vmatpush.msra.mxu0 %v56
    %80 = vmatpush.msra.mxu0 %v55
    %81 = vmatpush.msra.mxu0 %v54
    %82 = vmatpush.msra.mxu0 %v53
    %83 = vmatpush.msra.mxu0 %v52
    %84 = vmatmul.f32.gmra.mxu0 %v66
    %v85 = vpop.f32.mrf.mxu0
    %v86 = vadd.f32 %v62, %v85
    %87 = vdwg.mxu0
    %88 = vst.msk [vmem:[#allocation2] sm:$0xff] %vm27, %v86
    // Predicated region
    $region22: #{tpu_custom_call.1} parent=1 // pred_check
      _
    $region23: #{tpu_custom_call.1} parent=1 // pred_check_branch
      %90 = sbr.rel (0) target = $region25
    $region24: #{tpu_custom_call.1} parent=1 // pred_region
      %92 = vsyncadd [#allocation3], 0
      %s94 = sshll.u32 [#allocation2], 4
      %s95 = int_to_ptr.vmem [resolvable:$true] %s94
      %s96 = sshll.u32 %s5, 4
      %s97 = int_to_ptr.hbm [resolvable:$true] %s96
      %99 = dma.vmem_to_hbm [thread:$0]  %s95, 128, %s97, [#allocation3]
    $region25: #{tpu_custom_call.1} parent=1 // pred_fallthru
      _
    // Predicated region
    $region26: #{tpu_custom_call.1} parent=1 // pred_check
      _
    $region27: #{tpu_custom_call.1} parent=1 // pred_check_branch
      %101 = sbr.rel (0) target = $region29
    $region28: #{tpu_custom_call.1} parent=1 // pred_region
      %103 = dma.done [#allocation3], 128
    $region29: #{tpu_custom_call.1} parent=1 // pred_fallthru
      _
    %104 = vsyncpa [#allocation3], 1

</llo_original>
